<compile_context>
chip_gen: v6e
topology: v6e:2x2x1
jax: 0.10.0
libtpu: 0.0.40
codegen_flags: <defaults>
</compile_context>

<pallas_src>
import jax
import jax.numpy as jnp
from jax import lax
from jax.experimental import pallas as pl
from jax.experimental.pallas import tpu as pltpu


def fusion_kernel(drug_ref, cell_ref, w1a_ref, w1b_ref, b1_ref,
                  w2_ref, b2_ref, w3t_ref, b3t_ref, o_ref):
    cdt = w1a_ref.dtype  # compute dtype fed to the MXU (bf16 or f32)

    # ---- fc1 + ReLU. Concat is fused: split-K dot over (drug | cell). ----
    h1 = jnp.dot(drug_ref[...].astype(cdt), w1a_ref[...],
                 preferred_element_type=jnp.float32)
    h1 = h1 + jnp.dot(cell_ref[...].astype(cdt), w1b_ref[...],
                      preferred_element_type=jnp.float32)
    h1 = jnp.maximum(h1 + b1_ref[...], 0.0)
    # (dropout = identity at inference)

    # ---- fc2 + ReLU ----
    h2 = jnp.dot(h1.astype(cdt), w2_ref[...], preferred_element_type=jnp.float32)
    h2 = jnp.maximum(h2 + b2_ref[...], 0.0)

    # ---- fc3 + Sigmoid, computed transposed so the store is lane-dense ----
    # (fc3, fc2) contracted with (tb, fc2) on the fc2 axis -> (fc3, tb)
    z = lax.dot_general(
        w3t_ref[...], h2.astype(cdt),
        dimension_numbers=(((1,), (1,)), ((), ())),
        preferred_element_type=jnp.float32)
    z = z + b3t_ref[...]
    o_ref[...] = jax.nn.sigmoid(z).astype(o_ref.dtype)


def _round_up(n, m):
    return (n + m - 1) // m * m


def fusion_forward(drug, cell, params, *, compute_dtype=jnp.bfloat16,
                   block_b=4096):
    """Runs the Fusion MLP (inference). Returns (B, fc3_dim) float32."""
    (w1, b1, w2, b2, w3, b3) = params
    assert block_b % 128 == 0, "block_b must be a multiple of 128"

    B = drug.shape[0]
    d_drug = drug.shape[1]
    d_cell = cell.shape[1]
    fc1_dim = w1.shape[1]
    fc2_dim = w2.shape[1]
    fc3_dim = w3.shape[1]

    # Batch tiling.  No host-side padding: grid = cdiv(B, tb) and the partial
    # last block is masked by Pallas (rows are independent, so garbage rows in
    # a partial input tile only touch masked output lanes).
    if B <= 128:
        # Single tile; block == full array dims so any B is layout-legal.
        tb = B
    else:
        # >= 2 tiles (multiple of 128 for the lane-dense output block) so the
        # "parallel" batch axis is actually sharded across v7x's two TCs.
        tb = min(block_b, _round_up(pl.cdiv(B, 2), 128))
    grid = (pl.cdiv(B, tb),)
    const = lambda i: (0, 0)            # weights/biases: resident, DMA'd once

    out_t = pl.pallas_call(
        fusion_kernel,
        out_shape=jax.ShapeDtypeStruct((fc3_dim, B), jnp.float32),
        grid=grid,
        in_specs=[
            pl.BlockSpec((tb, d_drug), lambda i: (i, 0)),   # drug tile (pipelined)
            pl.BlockSpec((tb, d_cell), lambda i: (i, 0)),   # cell tile (pipelined)
            pl.BlockSpec((d_drug, fc1_dim), const),         # W1[:d_drug]
            pl.BlockSpec((d_cell, fc1_dim), const),         # W1[d_drug:]
            pl.BlockSpec((1, fc1_dim), const),              # b1
            pl.BlockSpec((fc1_dim, fc2_dim), const),        # W2
            pl.BlockSpec((1, fc2_dim), const),              # b2
            pl.BlockSpec((fc3_dim, fc2_dim), const),        # W3^T
            pl.BlockSpec((fc3_dim, 1), const),              # b3 (column)
        ],
        out_specs=pl.BlockSpec((fc3_dim, tb), lambda i: (0, i)),
        compiler_params=pltpu.CompilerParams(
            dimension_semantics=("parallel",),
            vmem_limit_bytes=48 * 1024 * 1024),
    )(
        drug,
        cell,
        w1[:d_drug].astype(compute_dtype),
        w1[d_drug:].astype(compute_dtype),
        b1.reshape(1, -1).astype(jnp.float32),
        w2.astype(compute_dtype),
        b2.reshape(1, -1).astype(jnp.float32),
        w3.T.astype(compute_dtype),
        b3.reshape(-1, 1).astype(jnp.float32),
    )

    # (fc3, B) -> (B, fc3); for fc3_dim == 1 this is a free reshape.
    return out_t.T


def init_linear(key, fan_in, fan_out):
    # PyTorch nn.Linear default: U(-1/sqrt(fan_in), 1/sqrt(fan_in))
    kw, kb = jax.random.split(key)
    bound = 1.0 / jnp.sqrt(float(fan_in))
    w = jax.random.uniform(kw, (fan_in, fan_out), jnp.float32, -bound, bound)
    b = jax.random.uniform(kb, (fan_out,), jnp.float32, -bound, bound)
    return w, b


def reference_forward(drug, cell, params):
    (w1, b1, w2, b2, w3, b3) = params
    x = jnp.concatenate([drug, cell], axis=1)
    x = jnp.maximum(x @ w1 + b1, 0.0)
    x = jnp.maximum(x @ w2 + b2, 0.0)
    return jax.nn.sigmoid(x @ w3 + b3)


if __name__ == "__main__":
    # Fusion(input_dim=(96, 32), fc_1_dim=64, fc_2_dim=32, fc_3_dim=1,
    #        fusion_mode='concat'), inference.
    d_drug, d_cell = 96, 32
    fc1_dim, fc2_dim, fc3_dim = 64, 32, 1

    key = jax.random.PRNGKey(0)
    k_drug, k_cell, k1, k2, k3 = jax.random.split(key, 5)

    w1, b1 = init_linear(k1, d_drug + d_cell, fc1_dim)
    w2, b2 = init_linear(k2, fc1_dim, fc2_dim)
    w3, b3 = init_linear(k3, fc2_dim, fc3_dim)
    params = (w1, b1, w2, b2, w3, b3)

    # --- small single-tile case (B = 8, block == full dims) ---
    B = 8
    drug = jax.random.normal(k_drug, (B, d_drug), jnp.float32)
    cell = jax.random.normal(k_cell, (B, d_cell), jnp.float32)
    ref = reference_forward(drug, cell, params)

    out_f32 = jax.block_until_ready(
        fusion_forward(drug, cell, params, compute_dtype=jnp.float32))
    assert out_f32.shape == (B, fc3_dim), out_f32.shape
    assert jnp.allclose(out_f32, ref, atol=5e-3), float(jnp.max(jnp.abs(out_f32 - ref)))

    out_bf16 = jax.block_until_ready(
        fusion_forward(drug, cell, params, compute_dtype=jnp.bfloat16))
    assert out_bf16.shape == (B, fc3_dim), out_bf16.shape
    assert jnp.allclose(out_bf16, ref, atol=2e-2), float(jnp.max(jnp.abs(out_bf16 - ref)))

    # --- multi-tile case: default tiling (B=272 -> tb=256, grid=2, masked tail) ---
    B2 = 272
    kd2, kc2 = jax.random.split(jax.random.PRNGKey(1))
    drug2 = jax.random.normal(kd2, (B2, d_drug), jnp.float32)
    cell2 = jax.random.normal(kc2, (B2, d_cell), jnp.float32)
    ref2 = reference_forward(drug2, cell2, params)
    out2 = jax.block_until_ready(
        fusion_forward(drug2, cell2, params, compute_dtype=jnp.float32))
    assert out2.shape == (B2, fc3_dim), out2.shape
    assert jnp.allclose(out2, ref2, atol=5e-3), float(jnp.max(jnp.abs(out2 - ref2)))

    # --- multi-tile case with small forced tile (tb=128, grid=3, masked tail) ---
    out3 = jax.block_until_ready(
        fusion_forward(drug2, cell2, params, compute_dtype=jnp.float32,
                       block_b=128))
    assert out3.shape == (B2, fc3_dim), out3.shape
    assert jnp.allclose(out3, ref2, atol=5e-3), float(jnp.max(jnp.abs(out3 - ref2)))

    print("KERNEL_OK")
</pallas_src>

<mosaic_0001>
module attributes {stable_mosaic.version = 11 : i64} {
  func.func @fusion_kernel(%arg0: i32, %arg1: memref<8x96xf32, #tpu.memory_space<vmem>>, %arg2: memref<8x32xf32, #tpu.memory_space<vmem>>, %arg3: memref<96x64xf32, #tpu.memory_space<vmem>>, %arg4: memref<32x64xf32, #tpu.memory_space<vmem>>, %arg5: memref<1x64xf32, #tpu.memory_space<vmem>>, %arg6: memref<64x32xf32, #tpu.memory_space<vmem>>, %arg7: memref<1x32xf32, #tpu.memory_space<vmem>>, %arg8: memref<1x32xf32, #tpu.memory_space<vmem>>, %arg9: memref<1x1xf32, #tpu.memory_space<vmem>>, %arg10: memref<1x8xf32, #tpu.memory_space<vmem>>) attributes {dimension_semantics = [#tpu.dimension_semantics<parallel>], iteration_bounds = array<i64: 1>, scalar_prefetch = 0 : i64, scratch_operands = 0 : i64, tpu.core_type = #tpu.core_type<tc>, window_params = [{transform_indices = @transform_0, window_bounds = array<i64: 8, 96>}, {transform_indices = @transform_1, window_bounds = array<i64: 8, 32>}, {pipeline_mode = #tpu.pipeline_mode<synchronous>, transform_indices = @transform_2, window_bounds = array<i64: 96, 64>}, {pipeline_mode = #tpu.pipeline_mode<synchronous>, transform_indices = @transform_3, window_bounds = array<i64: 32, 64>}, {pipeline_mode = #tpu.pipeline_mode<synchronous>, transform_indices = @transform_4, window_bounds = array<i64: 1, 64>}, {pipeline_mode = #tpu.pipeline_mode<synchronous>, transform_indices = @transform_5, window_bounds = array<i64: 64, 32>}, {pipeline_mode = #tpu.pipeline_mode<synchronous>, transform_indices = @transform_6, window_bounds = array<i64: 1, 32>}, {pipeline_mode = #tpu.pipeline_mode<synchronous>, transform_indices = @transform_7, window_bounds = array<i64: 1, 32>}, {pipeline_mode = #tpu.pipeline_mode<synchronous>, transform_indices = @transform_8, window_bounds = array<i64: 1, 1>}, {transform_indices = @transform_9, window_bounds = array<i64: 1, 8>}]} {
    %c0 = arith.constant 0 : index
    %c0_0 = arith.constant 0 : index
    %0 = vector.load %arg1[%c0, %c0_0] : memref<8x96xf32, #tpu.memory_space<vmem>>, vector<8x96xf32>
    %c0_1 = arith.constant 0 : index
    %c0_2 = arith.constant 0 : index
    %1 = vector.load %arg3[%c0_1, %c0_2] : memref<96x64xf32, #tpu.memory_space<vmem>>, vector<96x64xf32>
    %cst = arith.constant dense<0.000000e+00> : vector<8x64xf32>
    %2 = tpu.matmul %0, %1, %cst {dimension_numbers = #tpu.dot_dimension_numbers<[1], [0], [0], [1], [0, 0, 1, 1], [], []>} : vector<8x96xf32>, vector<96x64xf32>, vector<8x64xf32> -> vector<8x64xf32>
    %c0_3 = arith.constant 0 : index
    %c0_4 = arith.constant 0 : index
    %3 = vector.load %arg2[%c0_3, %c0_4] : memref<8x32xf32, #tpu.memory_space<vmem>>, vector<8x32xf32>
    %c0_5 = arith.constant 0 : index
    %c0_6 = arith.constant 0 : index
    %4 = vector.load %arg4[%c0_5, %c0_6] : memref<32x64xf32, #tpu.memory_space<vmem>>, vector<32x64xf32>
    %cst_7 = arith.constant dense<0.000000e+00> : vector<8x64xf32>
    %5 = tpu.matmul %3, %4, %cst_7 {dimension_numbers = #tpu.dot_dimension_numbers<[1], [0], [0], [1], [0, 0, 1, 1], [], []>} : vector<8x32xf32>, vector<32x64xf32>, vector<8x64xf32> -> vector<8x64xf32>
    %6 = arith.addf %2, %5 : vector<8x64xf32>
    %c0_8 = arith.constant 0 : index
    %c0_9 = arith.constant 0 : index
    %7 = vector.load %arg5[%c0_8, %c0_9] : memref<1x64xf32, #tpu.memory_space<vmem>>, vector<1x64xf32>
    %8 = vector.broadcast %7 : vector<1x64xf32> to vector<8x64xf32>
    %9 = arith.addf %6, %8 : vector<8x64xf32>
    %cst_10 = arith.constant 0.000000e+00 : f32
    %10 = vector.broadcast %cst_10 : f32 to vector<8x64xf32>
    %11 = arith.maximumf %9, %10 : vector<8x64xf32>
    %c0_11 = arith.constant 0 : index
    %c0_12 = arith.constant 0 : index
    %12 = vector.load %arg6[%c0_11, %c0_12] : memref<64x32xf32, #tpu.memory_space<vmem>>, vector<64x32xf32>
    %cst_13 = arith.constant dense<0.000000e+00> : vector<8x32xf32>
    %13 = tpu.matmul %11, %12, %cst_13 {dimension_numbers = #tpu.dot_dimension_numbers<[1], [0], [0], [1], [0, 0, 1, 1], [], []>} : vector<8x64xf32>, vector<64x32xf32>, vector<8x32xf32> -> vector<8x32xf32>
    %c0_14 = arith.constant 0 : index
    %c0_15 = arith.constant 0 : index
    %14 = vector.load %arg7[%c0_14, %c0_15] : memref<1x32xf32, #tpu.memory_space<vmem>>, vector<1x32xf32>
    %15 = vector.broadcast %14 : vector<1x32xf32> to vector<8x32xf32>
    %16 = arith.addf %13, %15 : vector<8x32xf32>
    %cst_16 = arith.constant 0.000000e+00 : f32
    %17 = vector.broadcast %cst_16 : f32 to vector<8x32xf32>
    %18 = arith.maximumf %16, %17 : vector<8x32xf32>
    %c0_17 = arith.constant 0 : index
    %c0_18 = arith.constant 0 : index
    %19 = vector.load %arg8[%c0_17, %c0_18] : memref<1x32xf32, #tpu.memory_space<vmem>>, vector<1x32xf32>
    %cst_19 = arith.constant dense<0.000000e+00> : vector<1x8xf32>
    %20 = tpu.matmul %19, %18, %cst_19 {dimension_numbers = #tpu.dot_dimension_numbers<[1], [1], [0], [0], [0, 0, 1, 0], [], []>} : vector<1x32xf32>, vector<8x32xf32>, vector<1x8xf32> -> vector<1x8xf32>
    %c0_20 = arith.constant 0 : index
    %c0_21 = arith.constant 0 : index
    %21 = vector.load %arg9[%c0_20, %c0_21] : memref<1x1xf32, #tpu.memory_space<vmem>>, vector<1x1xf32>
    %22 = vector.broadcast %21 : vector<1x1xf32> to vector<1x8xf32>
    %23 = arith.addf %20, %22 : vector<1x8xf32>
    %24 = arith.negf %23 : vector<1x8xf32>
    %25 = math.exp %24 : vector<1x8xf32>
    %cst_22 = arith.constant 1.000000e+00 : f32
    %26 = vector.broadcast %cst_22 : f32 to vector<1x8xf32>
    %27 = arith.addf %26, %25 : vector<1x8xf32>
    %28 = arith.divf %26, %27 : vector<1x8xf32>
    %c0_23 = arith.constant 0 : index
    %c0_24 = arith.constant 0 : index
    %29 = vector.load %arg10[%c0_23, %c0_24] : memref<1x8xf32, #tpu.memory_space<vmem>>, vector<1x8xf32>
    tpu.vector_store %arg10[%c0_23, %c0_24], %28 {strides = array<i32>} : memref<1x8xf32, #tpu.memory_space<vmem>>, vector<1x8xf32>,
    return
  }
  func.func @transform_0(%arg0: i32) -> (i32, i32) {
    %c0_i32 = arith.constant 0 : i32
    %c0_i32_0 = arith.constant 0 : i32
    return %arg0, %c0_i32 : i32, i32
  }
  func.func @transform_1(%arg0: i32) -> (i32, i32) {
    %c0_i32 = arith.constant 0 : i32
    %c0_i32_0 = arith.constant 0 : i32
    return %arg0, %c0_i32 : i32, i32
  }
  func.func @transform_2(%arg0: i32) -> (i32, i32) {
    %c0_i32 = arith.constant 0 : i32
    %c0_i32_0 = arith.constant 0 : i32
    %c0_i32_1 = arith.constant 0 : i32
    return %c0_i32, %c0_i32_0 : i32, i32
  }
  func.func @transform_3(%arg0: i32) -> (i32, i32) {
    %c0_i32 = arith.constant 0 : i32
    %c0_i32_0 = arith.constant 0 : i32
    %c0_i32_1 = arith.constant 0 : i32
    return %c0_i32, %c0_i32_0 : i32, i32
  }
  func.func @transform_4(%arg0: i32) -> (i32, i32) {
    %c0_i32 = arith.constant 0 : i32
    %c0_i32_0 = arith.constant 0 : i32
    %c0_i32_1 = arith.constant 0 : i32
    return %c0_i32, %c0_i32_0 : i32, i32
  }
  func.func @transform_5(%arg0: i32) -> (i32, i32) {
    %c0_i32 = arith.constant 0 : i32
    %c0_i32_0 = arith.constant 0 : i32
    %c0_i32_1 = arith.constant 0 : i32
    return %c0_i32, %c0_i32_0 : i32, i32
  }
  func.func @transform_6(%arg0: i32) -> (i32, i32) {
    %c0_i32 = arith.constant 0 : i32
    %c0_i32_0 = arith.constant 0 : i32
    %c0_i32_1 = arith.constant 0 : i32
    return %c0_i32, %c0_i32_0 : i32, i32
  }
  func.func @transform_7(%arg0: i32) -> (i32, i32) {
    %c0_i32 = arith.constant 0 : i32
    %c0_i32_0 = arith.constant 0 : i32
    %c0_i32_1 = arith.constant 0 : i32
    return %c0_i32, %c0_i32_0 : i32, i32
  }
  func.func @transform_8(%arg0: i32) -> (i32, i32) {
    %c0_i32 = arith.constant 0 : i32
    %c0_i32_0 = arith.constant 0 : i32
    %c0_i32_1 = arith.constant 0 : i32
    return %c0_i32, %c0_i32_0 : i32, i32
  }
  func.func @transform_9(%arg0: i32) -> (i32, i32) {
    %c0_i32 = arith.constant 0 : i32
    %c0_i32_0 = arith.constant 0 : i32
    return %c0_i32, %arg0 : i32, i32
  }
}

</mosaic_0001>

<llo_original>
// kernel: tpu_custom_call.1
$region0: #{tpu_custom_call.1}
  #allocation0 [shape = 'u32[]', space=smem, size = 0x4, offset = 0x4, fixed_abs, tag = 'smem constant byte address 0x4 - core index']
  #allocation1 [shape = 'u32[144,128]{1,0:T(1,128)}', space=vmem, size = 0x12000, scoped, tag = 'internal scratch']
  #allocation2 [shape = 'f32[1,1]{1,0:T(1,128)S(1)}', space=vmem, size = 0x200, scoped, tag = 'scoped memory for tpu_custom_call.1']
  %s0 = inlined_call_operand.vmem [shape: f32[8,96], index: 0, kind: input, shape index: {}]
  %s1 = inlined_call_operand.vmem [shape: f32[8,32], index: 1, kind: input, shape index: {}]
  %s2 = inlined_call_operand.vmem [shape: f32[96,64], index: 2, kind: input, shape index: {}]
  %s3 = inlined_call_operand.vmem [shape: f32[32,64], index: 3, kind: input, shape index: {}]
  %s4 = inlined_call_operand.vmem [shape: f32[1,64], index: 4, kind: input, shape index: {}]
  %s5 = inlined_call_operand.vmem [shape: f32[64,32], index: 5, kind: input, shape index: {}]
  %s6 = inlined_call_operand.vmem [shape: f32[1,32], index: 6, kind: input, shape index: {}]
  %s7 = inlined_call_operand.vmem [shape: f32[1,32], index: 7, kind: input, shape index: {}]
  %s8 = inlined_call_operand.<no memory space> [shape: f32[1,1], index: 8, kind: input, shape index: {}]
  %s9 = inlined_call_operand.hbm [shape: f32[1,8], index: 9, kind: output, shape index: {}]
  %s10 = sld [smem:[#allocation0]]
  $region46: #{tpu_custom_call.1} parent=0
    _
  %s12 = ssub.s32 1, %s10
  %s13 = scalar_select 0, %s12, %s10
  %v14 = vstv %s8
  %15 = vst [vmem:[#allocation2] sm:$0x1] %v14
  $region1: #{tpu_custom_call.1} parent=0
    #allocation3 [shape = 'u8[512]{0}', space=vmem, size = 0x400, scoped, tag = 'output window, operand 0, single buffered']
    #allocation4 [shape = 's32[1]{0}', space=sflag, size = 0x4, scoped, tag = 'scoped memory for tpu_custom_call.1']
    %16 = vsyncpa [#allocation4], 0
    // Predicated region
    $region2: #{tpu_custom_call.1} parent=1 // pred_check
      _
    $region3: #{tpu_custom_call.1} parent=1 // pred_check_branch
      %18 = sbr.rel (0) target = $region5
    $region4: #{tpu_custom_call.1} parent=1 // pred_region
      _
    $region5: #{tpu_custom_call.1} parent=1 // pred_fallthru
      _
    // Predicated region
    $region6: #{tpu_custom_call.1} parent=1 // pred_check
      _
    $region7: #{tpu_custom_call.1} parent=1 // pred_check_branch
      %20 = sbr.rel (0) target = $region9
    $region8: #{tpu_custom_call.1} parent=1 // pred_region
      _
    $region9: #{tpu_custom_call.1} parent=1 // pred_fallthru
      _
    // Predicated region
    $region10: #{tpu_custom_call.1} parent=1 // pred_check
      _
    $region11: #{tpu_custom_call.1} parent=1 // pred_check_branch
      %22 = sbr.rel (0) target = $region13
    $region12: #{tpu_custom_call.1} parent=1 // pred_region
      _
    $region13: #{tpu_custom_call.1} parent=1 // pred_fallthru
      _
    // Predicated region
    $region14: #{tpu_custom_call.1} parent=1 // pred_check
      _
    $region15: #{tpu_custom_call.1} parent=1 // pred_check_branch
      %24 = sbr.rel (0) target = $region17
    $region16: #{tpu_custom_call.1} parent=1 // pred_region
      _
    $region17: #{tpu_custom_call.1} parent=1 // pred_fallthru
      _
    // Predicated region
    $region18: #{tpu_custom_call.1} parent=1 // pred_check
      _
    $region19: #{tpu_custom_call.1} parent=1 // pred_check_branch
      %26 = sbr.rel (0) target = $region21
    $region20: #{tpu_custom_call.1} parent=1 // pred_region
      _
    $region21: #{tpu_custom_call.1} parent=1 // pred_fallthru
      _
    // Predicated region
    $region22: #{tpu_custom_call.1} parent=1 // pred_check
      _
    $region23: #{tpu_custom_call.1} parent=1 // pred_check_branch
      %28 = sbr.rel (0) target = $region25
    $region24: #{tpu_custom_call.1} parent=1 // pred_region
      _
    $region25: #{tpu_custom_call.1} parent=1 // pred_fallthru
      _
    // Predicated region
    $region26: #{tpu_custom_call.1} parent=1 // pred_check
      _
    $region27: #{tpu_custom_call.1} parent=1 // pred_check_branch
      %30 = sbr.rel (0) target = $region29
    $region28: #{tpu_custom_call.1} parent=1 // pred_region
      _
    $region29: #{tpu_custom_call.1} parent=1 // pred_fallthru
      _
    // Predicated region
    $region30: #{tpu_custom_call.1} parent=1 // pred_check
      _
    $region31: #{tpu_custom_call.1} parent=1 // pred_check_branch
      %32 = sbr.rel (0) target = $region33
    $region32: #{tpu_custom_call.1} parent=1 // pred_region
      _
    $region33: #{tpu_custom_call.1} parent=1 // pred_fallthru
      _
    // Predicated region
    $region34: #{tpu_custom_call.1} parent=1 // pred_check
      _
    $region35: #{tpu_custom_call.1} parent=1 // pred_check_branch
      %34 = sbr.rel (0) target = $region37
    $region36: #{tpu_custom_call.1} parent=1 // pred_region
      _
    $region37: #{tpu_custom_call.1} parent=1 // pred_fallthru
      _
    %v35 = vld [vmem:[%s0] sm:$0xff]
    %v36 = vld [vmem:[%s2] sm:$0xff]
    %v37 = vld [vmem:[%s2 + $0x8] sm:$0xff]
    %v38 = vld [vmem:[%s2 + $0x10] sm:$0xff]
    %v39 = vld [vmem:[%s2 + $0x18] sm:$0xff]
    %v40 = vld [vmem:[%s2 + $0x20] sm:$0xff]
    %v41 = vld [vmem:[%s2 + $0x28] sm:$0xff]
    %v42 = vld [vmem:[%s2 + $0x30] sm:$0xff]
    %v43 = vld [vmem:[%s2 + $0x38] sm:$0xff]
    %v44 = vld [vmem:[%s2 + $0x40] sm:$0xff]
    %v45 = vld [vmem:[%s2 + $0x48] sm:$0xff]
    %v46 = vld [vmem:[%s2 + $0x50] sm:$0xff]
    %v47 = vld [vmem:[%s2 + $0x58] sm:$0xff]
    %v48 = vld [vmem:[%s1] sm:$0xff]
    %v49 = vld [vmem:[%s3] sm:$0xff]
    %v50 = vld [vmem:[%s3 + $0x8] sm:$0xff]
    %v51 = vld [vmem:[%s3 + $0x10] sm:$0xff]
    %v52 = vld [vmem:[%s3 + $0x18] sm:$0xff]
    %vm53 = vcmask 261120
    %v55 = vsel %vm53, %v48, 0
    %57 = vmatprep.subr.mxu0 0.0
    %58 = vmatpush1.msra.mxu0 0.0
    %59 = vmatprep.subr.mxu0 0.0
    %60 = vmatpush1.msra.mxu0 0.0
    %61 = vmatprep.subr.mxu0 0.0
    %62 = vmatpush1.msra.mxu0 0.0
    %63 = vmatprep.subr.mxu0 0.0
    %64 = vmatpush1.msra.mxu0 0.0
    %65 = vmatprep.subr.mxu0 0.0
    %66 = vmatpush1.msra.mxu0 0.0
    %67 = vmatprep.subr.mxu0 0.0
    %68 = vmatpush1.msra.mxu0 0.0
    %69 = vmatprep.subr.mxu0 0.0
    %70 = vmatpush1.msra.mxu0 0.0
    %71 = vmatprep.subr.mxu0 0.0
    %72 = vmatpush1.msra.mxu0 0.0
    %73 = vmatprep.subr.mxu0 0.0
    %74 = vmatpush1.msra.mxu0 0.0
    %75 = vmatprep.subr.mxu0 0.0
    %76 = vmatpush1.msra.mxu0 0.0
    %77 = vmatprep.subr.mxu0 0.0
    %78 = vmatpush1.msra.mxu0 0.0
    %79 = vmatprep.subr.mxu0 0.0
    %80 = vmatpush1.msra.mxu0 0.0
    %81 = vmatprep.subr.mxu0 0.0
    %82 = vmatpush1.msra.mxu0 %v52
    %83 = vmatprep.subr.mxu0 0.0
    %84 = vmatpush1.msra.mxu0 %v51
    %85 = vmatprep.subr.mxu0 0.0
    %86 = vmatpush1.msra.mxu0 %v50
    %87 = vmatprep.subr.mxu0 0.0
    %88 = vmatpush1.msra.mxu0 %v49
    %89 = vmatprep.subr.mxu0 0.0
    %90 = vmatpush2.msra.mxu0 0.0
    %91 = vmatprep.subr.mxu0 0.0
    %92 = vmatpush2.msra.mxu0 0.0
    %93 = vmatprep.subr.mxu0 0.0
    %94 = vmatpush2.msra.mxu0 0.0
    %95 = vmatprep.subr.mxu0 0.0
    %96 = vmatpush2.msra.mxu0 0.0
    %97 = vmatprep.subr.mxu0 0.0
    %98 = vmatpush2.msra.mxu0 0.0
    %99 = vmatprep.subr.mxu0 0.0
    %100 = vmatpush2.msra.mxu0 0.0
    %101 = vmatprep.subr.mxu0 0.0
    %102 = vmatpush2.msra.mxu0 0.0
    %103 = vmatprep.subr.mxu0 0.0
    %104 = vmatpush2.msra.mxu0 0.0
    %105 = vmatprep.subr.mxu0 0.0
    %106 = vmatpush2.msra.mxu0 0.0
    %107 = vmatprep.subr.mxu0 0.0
    %108 = vmatpush2.msra.mxu0 0.0
    %109 = vmatprep.subr.mxu0 0.0
    %110 = vmatpush2.msra.mxu0 0.0
    %111 = vmatprep.subr.mxu0 0.0
    %112 = vmatpush2.msra.mxu0 0.0
    %113 = vmatprep.subr.mxu0 0.0
    %114 = vmatpush2.msra.mxu0 0.0
    %115 = vmatprep.subr.mxu0 0.0
    %116 = vmatpush2.msra.mxu0 0.0
    %117 = vmatprep.subr.mxu0 0.0
    %118 = vmatpush2.msra.mxu0 0.0
    %119 = vmatprep.subr.mxu0 0.0
    %120 = vmatpush2.msra.mxu0 0.0
    %121 = vmatprep.mubr.f32.mxu0 0.0
    %122 = vmatmul.mubr.f32.gmra.mxu0 %v55
    %v123 = vpop.f32.mrf.mxu0
    %v124 = vadd.f32 0.0, %v123
    %v125 = vpop.f32.mrf.mxu0
    %126 = vdwg.mxu0
    %vm127 = vcmask 785408
    %v129 = vsel %vm127, %v35, 0
    %131 = vmatprep.subr.mxu0 0.0
    %132 = vmatpush1.msra.mxu0 0.0
    %133 = vmatprep.subr.mxu0 0.0
    %134 = vmatpush1.msra.mxu0 0.0
    %135 = vmatprep.subr.mxu0 0.0
    %136 = vmatpush1.msra.mxu0 0.0
    %137 = vmatprep.subr.mxu0 0.0
    %138 = vmatpush1.msra.mxu0 0.0
    %139 = vmatprep.subr.mxu0 0.0
    %140 = vmatpush1.msra.mxu0 %v47
    %141 = vmatprep.subr.mxu0 0.0
    %142 = vmatpush1.msra.mxu0 %v46
    %143 = vmatprep.subr.mxu0 0.0
    %144 = vmatpush1.msra.mxu0 %v45
    %145 = vmatprep.subr.mxu0 0.0
    %146 = vmatpush1.msra.mxu0 %v44
    %147 = vmatprep.subr.mxu0 0.0
    %148 = vmatpush1.msra.mxu0 %v43
    %149 = vmatprep.subr.mxu0 0.0
    %150 = vmatpush1.msra.mxu0 %v42
    %151 = vmatprep.subr.mxu0 0.0
    %152 = vmatpush1.msra.mxu0 %v41
    %153 = vmatprep.subr.mxu0 0.0
    %154 = vmatpush1.msra.mxu0 %v40
    %155 = vmatprep.subr.mxu0 0.0
    %156 = vmatpush1.msra.mxu0 %v39
    %157 = vmatprep.subr.mxu0 0.0
    %158 = vmatpush1.msra.mxu0 %v38
    %159 = vmatprep.subr.mxu0 0.0
    %160 = vmatpush1.msra.mxu0 %v37
    %161 = vmatprep.subr.mxu0 0.0
    %162 = vmatpush1.msra.mxu0 %v36
    %163 = vmatprep.subr.mxu0 0.0
    %164 = vmatpush2.msra.mxu0 0.0
    %165 = vmatprep.subr.mxu0 0.0
    %166 = vmatpush2.msra.mxu0 0.0
    %167 = vmatprep.subr.mxu0 0.0
    %168 = vmatpush2.msra.mxu0 0.0
    %169 = vmatprep.subr.mxu0 0.0
    %170 = vmatpush2.msra.mxu0 0.0
    %171 = vmatprep.subr.mxu0 0.0
    %172 = vmatpush2.msra.mxu0 0.0
    %173 = vmatprep.subr.mxu0 0.0
    %174 = vmatpush2.msra.mxu0 0.0
    %175 = vmatprep.subr.mxu0 0.0
    %176 = vmatpush2.msra.mxu0 0.0
    %177 = vmatprep.subr.mxu0 0.0
    %178 = vmatpush2.msra.mxu0 0.0
    %179 = vmatprep.subr.mxu0 0.0
    %180 = vmatpush2.msra.mxu0 0.0
    %181 = vmatprep.subr.mxu0 0.0
    %182 = vmatpush2.msra.mxu0 0.0
    %183 = vmatprep.subr.mxu0 0.0
    %184 = vmatpush2.msra.mxu0 0.0
    %185 = vmatprep.subr.mxu0 0.0
    %186 = vmatpush2.msra.mxu0 0.0
    %187 = vmatprep.subr.mxu0 0.0
    %188 = vmatpush2.msra.mxu0 0.0
    %189 = vmatprep.subr.mxu0 0.0
    %190 = vmatpush2.msra.mxu0 0.0
    %191 = vmatprep.subr.mxu0 0.0
    %192 = vmatpush2.msra.mxu0 0.0
    %193 = vmatprep.subr.mxu0 0.0
    %194 = vmatpush2.msra.mxu0 0.0
    %195 = vmatprep.mubr.f32.mxu0 0.0
    %196 = vmatmul.mubr.f32.gmra.mxu0 %v129
    %v197 = vpop.f32.mrf.mxu0
    %v198 = vadd.f32 %v124, %v197
    %v199 = vpop.f32.mrf.mxu0
    %200 = vdwg.mxu0
    %v201 = vld [vmem:[%s4] sm:$0x1]
    %v203 = vlaneseq
    %v204 = vshrl.u32 %v203, 7
    %v205 = vsub.s32 0, %v204
    %v206 = vrot.slane %v201, %v205
    %v208 = vadd.f32 %v198, %v206
    %v209 = vmax.f32 %v208, 0.0
    %v210 = vld [vmem:[%s5] sm:$0xff]
    %v211 = vld [vmem:[%s5 + $0x8] sm:$0xff]
    %v212 = vld [vmem:[%s5 + $0x10] sm:$0xff]
    %v213 = vld [vmem:[%s5 + $0x18] sm:$0xff]
    %v214 = vld [vmem:[%s5 + $0x20] sm:$0xff]
    %v215 = vld [vmem:[%s5 + $0x28] sm:$0xff]
    %v216 = vld [vmem:[%s5 + $0x30] sm:$0xff]
    %v217 = vld [vmem:[%s5 + $0x38] sm:$0xff]
    %v218 = vld [vmem:[%s6] sm:$0x1]
    %v220 = vlaneseq
    %v221 = vshrl.u32 %v220, 7
    %v222 = vsub.s32 0, %v221
    %v223 = vrot.slane %v218, %v222
    %vm225 = vcmask 523264
    %v227 = vsel %vm225, %v209, 0
    %229 = vmatprep.subr.mxu0 0.0
    %230 = vmatpush1.msra.mxu0 0.0
    %231 = vmatprep.subr.mxu0 0.0
    %232 = vmatpush1.msra.mxu0 0.0
    %233 = vmatprep.subr.mxu0 0.0
    %234 = vmatpush1.msra.mxu0 0.0
    %235 = vmatprep.subr.mxu0 0.0
    %236 = vmatpush1.msra.mxu0 0.0
    %237 = vmatprep.subr.mxu0 0.0
    %238 = vmatpush1.msra.mxu0 0.0
    %239 = vmatprep.subr.mxu0 0.0
    %240 = vmatpush1.msra.mxu0 0.0
    %241 = vmatprep.subr.mxu0 0.0
    %242 = vmatpush1.msra.mxu0 0.0
    %243 = vmatprep.subr.mxu0 0.0
    %244 = vmatpush1.msra.mxu0 0.0
    %245 = vmatprep.subr.mxu0 0.0
    %246 = vmatpush1.msra.mxu0 %v217
    %247 = vmatprep.subr.mxu0 0.0
    %248 = vmatpush1.msra.mxu0 %v216
    %249 = vmatprep.subr.mxu0 0.0
    %250 = vmatpush1.msra.mxu0 %v215
    %251 = vmatprep.subr.mxu0 0.0
    %252 = vmatpush1.msra.mxu0 %v214
    %253 = vmatprep.subr.mxu0 0.0
    %254 = vmatpush1.msra.mxu0 %v213
    %255 = vmatprep.subr.mxu0 0.0
    %256 = vmatpush1.msra.mxu0 %v212
    %257 = vmatprep.subr.mxu0 0.0
    %258 = vmatpush1.msra.mxu0 %v211
    %259 = vmatprep.subr.mxu0 0.0
    %260 = vmatpush1.msra.mxu0 %v210
    %261 = vmatprep.subr.mxu0 0.0
    %262 = vmatpush2.msra.mxu0 0.0
    %263 = vmatprep.subr.mxu0 0.0
    %264 = vmatpush2.msra.mxu0 0.0
    %265 = vmatprep.subr.mxu0 0.0
    %266 = vmatpush2.msra.mxu0 0.0
    %267 = vmatprep.subr.mxu0 0.0
    %268 = vmatpush2.msra.mxu0 0.0
    %269 = vmatprep.subr.mxu0 0.0
    %270 = vmatpush2.msra.mxu0 0.0
    %271 = vmatprep.subr.mxu0 0.0
    %272 = vmatpush2.msra.mxu0 0.0
    %273 = vmatprep.subr.mxu0 0.0
    %274 = vmatpush2.msra.mxu0 0.0
    %275 = vmatprep.subr.mxu0 0.0
    %276 = vmatpush2.msra.mxu0 0.0
    %277 = vmatprep.subr.mxu0 0.0
    %278 = vmatpush2.msra.mxu0 0.0
    %279 = vmatprep.subr.mxu0 0.0
    %280 = vmatpush2.msra.mxu0 0.0
    %281 = vmatprep.subr.mxu0 0.0
    %282 = vmatpush2.msra.mxu0 0.0
    %283 = vmatprep.subr.mxu0 0.0
    %284 = vmatpush2.msra.mxu0 0.0
    %285 = vmatprep.subr.mxu0 0.0
    %286 = vmatpush2.msra.mxu0 0.0
    %287 = vmatprep.subr.mxu0 0.0
    %288 = vmatpush2.msra.mxu0 0.0
    %289 = vmatprep.subr.mxu0 0.0
    %290 = vmatpush2.msra.mxu0 0.0
    %291 = vmatprep.subr.mxu0 0.0
    %292 = vmatpush2.msra.mxu0 0.0
    %293 = vmatprep.mubr.f32.mxu0 0.0
    %294 = vmatmul.mubr.f32.gmra.mxu0 %v227
    %v295 = vpop.f32.mrf.mxu0
    %v296 = vadd.f32 %v223, %v295
    %v297 = vpop.f32.mrf.mxu0
    %298 = vdwg.mxu0
    %v299 = vmax.f32 %v296, 0.0
    %v300 = vld [vmem:[%s7] sm:$0x1]
    %v301 = vld [vmem:[#allocation2] sm:$0x1]
    %303 = vset.pattern.permute.xlu0 0
    %304 = vperm.xlu0 %303, %v301
    %v305 = vpop.permute.xlu0 %304
    %v307 = vlaneseq
    %v308 = vshrl.u32 %v307, 7
    %v309 = vsub.s32 0, %v308
    %v310 = vrot.slane %v305, %v309
    %v312 = vsel %vm53, %v300, 0
    %v315 = vsel %vm53, %v299, 0
    %317 = vmatprep.subr.mxu0 0.0
    %318 = vmatpush1.xpose.msra.mxu0 0.0
    %319 = vmatprep.subr.mxu0 0.0
    %320 = vmatpush1.xpose.msra.mxu0 0.0
    %321 = vmatprep.subr.mxu0 0.0
    %322 = vmatpush1.xpose.msra.mxu0 0.0
    %323 = vmatprep.subr.mxu0 0.0
    %324 = vmatpush1.xpose.msra.mxu0 0.0
    %325 = vmatprep.subr.mxu0 0.0
    %326 = vmatpush1.xpose.msra.mxu0 0.0
    %327 = vmatprep.subr.mxu0 0.0
    %328 = vmatpush1.xpose.msra.mxu0 0.0
    %329 = vmatprep.subr.mxu0 0.0
    %330 = vmatpush1.xpose.msra.mxu0 0.0
    %331 = vmatprep.subr.mxu0 0.0
    %332 = vmatpush1.xpose.msra.mxu0 0.0
    %333 = vmatprep.subr.mxu0 0.0
    %334 = vmatpush1.xpose.msra.mxu0 0.0
    %335 = vmatprep.subr.mxu0 0.0
    %336 = vmatpush1.xpose.msra.mxu0 0.0
    %337 = vmatprep.subr.mxu0 0.0
    %338 = vmatpush1.xpose.msra.mxu0 0.0
    %339 = vmatprep.subr.mxu0 0.0
    %340 = vmatpush1.xpose.msra.mxu0 0.0
    %341 = vmatprep.subr.mxu0 0.0
    %342 = vmatpush1.xpose.msra.mxu0 0.0
    %343 = vmatprep.subr.mxu0 0.0
    %344 = vmatpush1.xpose.msra.mxu0 0.0
    %345 = vmatprep.subr.mxu0 0.0
    %346 = vmatpush1.xpose.msra.mxu0 0.0
    %347 = vmatprep.subr.mxu0 0.0
    %348 = vmatpush1.xpose.msra.mxu0 %v315
    %349 = vmatprep.subr.mxu0 0.0
    %350 = vmatpush2.xpose.msra.mxu0 0.0
    %351 = vmatprep.subr.mxu0 0.0
    %352 = vmatpush2.xpose.msra.mxu0 0.0
    %353 = vmatprep.subr.mxu0 0.0
    %354 = vmatpush2.xpose.msra.mxu0 0.0
    %355 = vmatprep.subr.mxu0 0.0
    %356 = vmatpush2.xpose.msra.mxu0 0.0
    %357 = vmatprep.subr.mxu0 0.0
    %358 = vmatpush2.xpose.msra.mxu0 0.0
    %359 = vmatprep.subr.mxu0 0.0
    %360 = vmatpush2.xpose.msra.mxu0 0.0
    %361 = vmatprep.subr.mxu0 0.0
    %362 = vmatpush2.xpose.msra.mxu0 0.0
    %363 = vmatprep.subr.mxu0 0.0
    %364 = vmatpush2.xpose.msra.mxu0 0.0
    %365 = vmatprep.subr.mxu0 0.0
    %366 = vmatpush2.xpose.msra.mxu0 0.0
    %367 = vmatprep.subr.mxu0 0.0
    %368 = vmatpush2.xpose.msra.mxu0 0.0
    %369 = vmatprep.subr.mxu0 0.0
    %370 = vmatpush2.xpose.msra.mxu0 0.0
    %371 = vmatprep.subr.mxu0 0.0
    %372 = vmatpush2.xpose.msra.mxu0 0.0
    %373 = vmatprep.subr.mxu0 0.0
    %374 = vmatpush2.xpose.msra.mxu0 0.0
    %375 = vmatprep.subr.mxu0 0.0
    %376 = vmatpush2.xpose.msra.mxu0 0.0
    %377 = vmatprep.subr.mxu0 0.0
    %378 = vmatpush2.xpose.msra.mxu0 0.0
    %379 = vmatprep.subr.mxu0 0.0
    %380 = vmatpush2.xpose.msra.mxu0 0.0
    %381 = vmatprep.mubr.f32.mxu0 0.0
    %382 = vmatmul.mubr.f32.gmra.mxu0 %v312
    %v383 = vpop.f32.mrf.mxu0
    %v384 = vadd.f32 %v310, %v383
    %v385 = vpop.f32.mrf.mxu0
    %386 = vdwg.mxu0
    %v387 = vxor.u32 %v384, 2147483648
    %v388 = vmul.f32 %v387, 1.442695
    %v389 = vpow.pop %v388
    %v390 = vadd.f32 %v389, 1.0
    %v391 = vrcp.pop %v390
    %v392 = vmul.f32 1.0, %v391
    %vm393 = vcmask 57344
    %394 = vst.msk [vmem:[#allocation3] sm:$0x1] %vm393, %v392
    // Predicated region
    $region38: #{tpu_custom_call.1} parent=1 // pred_check
      _
    $region39: #{tpu_custom_call.1} parent=1 // pred_check_branch
      %396 = sbr.rel (0) target = $region41
    $region40: #{tpu_custom_call.1} parent=1 // pred_region
      %s398 = ssub.s32 16, 16
      %399 = vsyncadd [#allocation4], %s398
      %s401 = sshll.u32 [#allocation3], 4
      %s402 = int_to_ptr.vmem [resolvable:$true] %s401
      %404 = dma.vmem_to_hbm [thread:$0]  %s402, 16, %s9, [#allocation4]
    $region41: #{tpu_custom_call.1} parent=1 // pred_fallthru
      _
    // Predicated region
    $region42: #{tpu_custom_call.1} parent=1 // pred_check
      _
    $region43: #{tpu_custom_call.1} parent=1 // pred_check_branch
      %406 = sbr.rel (0) target = $region45
    $region44: #{tpu_custom_call.1} parent=1 // pred_region
      %407 = dma.done [#allocation4], 16
    $region45: #{tpu_custom_call.1} parent=1 // pred_fallthru
      _
    %408 = vsyncpa [#allocation4], 1

</llo_original>
